<compile_context>
chip_gen: v7x
topology: tpu7x:2x2x1
jax: 0.10.0
libtpu: 0.0.40
codegen_flags: <defaults>
</compile_context>

<pallas_src>
import math
import jax
import jax.numpy as jnp
from jax.experimental import pallas as pl
from jax.experimental.pallas import tpu as pltpu


def _self_attention_kernel(h_ref, a_ref, bt_ref, o_ref):
    """Fused batched self-attention.

    h_ref : (B, N, dim) f32      o_ref : (B, 1, dim) f32
    a_ref : (dim, da)   f32      bt_ref: (1, 1, da)  f32  (b transposed once, host side)
    """
    B, N, dim = h_ref.shape
    da = a_ref.shape[1]

    h = h_ref[...]                                               # (B, N, dim)

    # ONE width-matched MXU push for the whole batch: (B*N, dim) @ (dim, da).
    # Leading-dim collapse keeps the lane (dim) axis untouched -> free reshape.
    t = jnp.tanh(
        jnp.dot(h.reshape(B * N, dim), a_ref[...],
                preferred_element_type=jnp.float32))             # (B*N, da)
    t3 = t.reshape(B, N, da)                                     # leading split, free

    # logits = t @ b as a VPU broadcast-multiply + lane reduction
    # (no 1-column MXU matmul).
    logits = jnp.sum(t3 * bt_ref[...], axis=2, keepdims=True)    # (B, N, 1)

    # Per-problem numerically stable softmax over N (sublane reductions).
    m = jnp.max(logits, axis=1, keepdims=True)                   # (B, 1, 1)
    e = jnp.exp(logits - m)                                      # (B, N, 1)
    denom = jnp.sum(e, axis=1, keepdims=True)                    # (B, 1, 1)
    inv = pl.reciprocal(denom, approx=True)                      # EUP slot
    inv = inv * (2.0 - denom * inv)                              # Newton step -> ~f32 exact
    attn = e * inv                                               # (B, N, 1)

    # output = attention @ hidden as a broadcast weighted sum + sublane
    # reduction (no 1-row MXU matmul, no transpose of attn).
    o_ref[...] = jnp.sum(attn * h, axis=1, keepdims=True)        # (B, 1, dim)


def self_attention_layer_batched(hidden, a, bt):
    """hidden: (B, N, dim) f32, a: (dim, da) f32, bt: (1, 1, da) f32 -> (B, dim) f32.

    Whole batch in a single grid-less pallas_call (whole-array VMEM blocks):
    no per-grid-step pipeline overhead, one input DMA, one output DMA, one
    MXU-width-matched projection for all B problems.
    """
    B, N, dim = hidden.shape
    da = a.shape[1]
    assert a.shape == (dim, da) and bt.shape == (1, 1, da)

    out = pl.pallas_call(
        _self_attention_kernel,
        out_shape=jax.ShapeDtypeStruct((B, 1, dim), jnp.float32),
        in_specs=[
            pl.BlockSpec(memory_space=pltpu.MemorySpace.VMEM),
            pl.BlockSpec(memory_space=pltpu.MemorySpace.VMEM),
            pl.BlockSpec(memory_space=pltpu.MemorySpace.VMEM),
        ],
        out_specs=pl.BlockSpec(memory_space=pltpu.MemorySpace.VMEM),
    )(hidden, a, bt)
    return out[:, 0, :]                                          # (B, dim)


def self_attention_layer(hidden, a, bt):
    """Single problem (module call shape): hidden (N, dim) -> (dim,).

    Reuses the batched kernel with B=1.  (An 8-row MXU push wastes most of the
    systolic array, but it is sub-microsecond and keeps one verified code path;
    the projection could be moved to the VPU here if this path ever mattered.)
    """
    out = self_attention_layer_batched(hidden[None], a, bt)
    return out[0]                                                # (dim,)


def _xavier_uniform(key, shape, gain=1.414):
    fan_in, fan_out = shape[0], shape[1]
    bound = gain * math.sqrt(6.0 / (fan_in + fan_out))
    return jax.random.uniform(key, shape, jnp.float32, minval=-bound, maxval=bound)


def _reference(hidden, a, b):
    logits = jnp.squeeze(jnp.matmul(jnp.tanh(jnp.matmul(hidden, a)), b), axis=1)
    attention = jax.nn.softmax(logits)
    return jnp.matmul(attention, hidden)


if __name__ == "__main__":
    # Small shapes consistent with the module: N nodes, dim features, da attn dim.
    # B*N = 128 rows fills a v5e MXU push; use B=32 (256 rows) on v6e/v7x when
    # the batch permits.
    N, dim, da = 8, 32, 16
    B = 16

    key = jax.random.PRNGKey(0)
    k_h, k_a, k_b = jax.random.split(key, 3)

    hidden_batch = jax.random.normal(k_h, (B, N, dim), jnp.float32)
    a = _xavier_uniform(k_a, (dim, da), gain=1.414)
    b = _xavier_uniform(k_b, (da, 1), gain=1.414)

    # Hoisted once at parameter setup (static module weight), not per call.
    bt = jnp.transpose(b).reshape(1, 1, da)

    # Batched path: the whole batch in ONE grid-less pallas_call.
    out_b = self_attention_layer_batched(hidden_batch, a, bt)
    jax.block_until_ready(out_b)
    ref_b = jax.vmap(lambda h: _reference(h, a, b))(hidden_batch)
    assert out_b.shape == (B, dim)
    assert jnp.allclose(out_b, ref_b, atol=1e-4, rtol=1e-4), "batched mismatch vs reference"

    # Single-problem path (original module call shape).
    out_1 = self_attention_layer(hidden_batch[0], a, bt)
    jax.block_until_ready(out_1)
    ref_1 = _reference(hidden_batch[0], a, b)
    assert out_1.shape == (dim,)
    assert jnp.allclose(out_1, ref_1, atol=1e-4, rtol=1e-4), "single mismatch vs reference"

    print("KERNEL_OK")
</pallas_src>

<mosaic_0001>
module attributes {stable_mosaic.version = 11 : i64} {
  func.func @_self_attention_kernel(%arg0: memref<16x8x32xf32, #tpu.memory_space<vmem>>, %arg1: memref<32x16xf32, #tpu.memory_space<vmem>>, %arg2: memref<1x1x16xf32, #tpu.memory_space<vmem>>, %arg3: memref<16x1x32xf32, #tpu.memory_space<vmem>>) attributes {dimension_semantics = [], scalar_prefetch = 0 : i64, scratch_operands = 0 : i64, tpu.core_type = #tpu.core_type<tc>} {
    %c0 = arith.constant 0 : index
    %c0_0 = arith.constant 0 : index
    %c0_1 = arith.constant 0 : index
    %0 = vector.load %arg0[%c0, %c0_0, %c0_1] : memref<16x8x32xf32, #tpu.memory_space<vmem>>, vector<16x8x32xf32>
    %1 = vector.shape_cast %0 : vector<16x8x32xf32> to vector<128x32xf32>
    %c0_2 = arith.constant 0 : index
    %c0_3 = arith.constant 0 : index
    %2 = vector.load %arg1[%c0_2, %c0_3] : memref<32x16xf32, #tpu.memory_space<vmem>>, vector<32x16xf32>
    %cst = arith.constant dense<0.000000e+00> : vector<128x16xf32>
    %3 = tpu.matmul %1, %2, %cst {dimension_numbers = #tpu.dot_dimension_numbers<[1], [0], [0], [1], [0, 0, 1, 1], [], []>} : vector<128x32xf32>, vector<32x16xf32>, vector<128x16xf32> -> vector<128x16xf32>
    %4 = math.tanh %3 : vector<128x16xf32>
    %5 = vector.shape_cast %4 : vector<128x16xf32> to vector<16x8x16xf32>
    %c0_4 = arith.constant 0 : index
    %c0_5 = arith.constant 0 : index
    %c0_6 = arith.constant 0 : index
    %6 = vector.load %arg2[%c0_4, %c0_5, %c0_6] : memref<1x1x16xf32, #tpu.memory_space<vmem>>, vector<1x1x16xf32>
    %7 = vector.broadcast %6 : vector<1x1x16xf32> to vector<16x8x16xf32>
    %8 = arith.mulf %5, %7 : vector<16x8x16xf32>
    %cst_7 = arith.constant dense<0.000000e+00> : vector<16x8xf32>
    %9 = vector.multi_reduction <add>, %8, %cst_7 [2] : vector<16x8x16xf32> to vector<16x8xf32>
    %10 = vector.shape_cast %9 : vector<16x8xf32> to vector<16x8x1xf32>
    %cst_8 = arith.constant dense<0xFF800000> : vector<16x1xf32>
    %11 = vector.multi_reduction <maximumf>, %10, %cst_8 [1] : vector<16x8x1xf32> to vector<16x1xf32>
    %12 = vector.shape_cast %11 : vector<16x1xf32> to vector<16x1x1xf32>
    %13 = vector.broadcast %12 : vector<16x1x1xf32> to vector<16x8x1xf32>
    %14 = arith.subf %10, %13 : vector<16x8x1xf32>
    %15 = math.exp %14 : vector<16x8x1xf32>
    %cst_9 = arith.constant dense<0.000000e+00> : vector<16x1xf32>
    %16 = vector.multi_reduction <add>, %15, %cst_9 [1] : vector<16x8x1xf32> to vector<16x1xf32>
    %17 = vector.shape_cast %16 : vector<16x1xf32> to vector<16x1x1xf32>
    %18 = tpu.reciprocal %17 {approx = true} : vector<16x1x1xf32> -> vector<16x1x1xf32>
    %19 = arith.mulf %17, %18 : vector<16x1x1xf32>
    %cst_10 = arith.constant 2.000000e+00 : f32
    %20 = vector.broadcast %cst_10 : f32 to vector<16x1x1xf32>
    %21 = arith.subf %20, %19 : vector<16x1x1xf32>
    %22 = arith.mulf %18, %21 : vector<16x1x1xf32>
    %23 = vector.broadcast %22 : vector<16x1x1xf32> to vector<16x8x1xf32>
    %24 = arith.mulf %15, %23 : vector<16x8x1xf32>
    %25 = vector.broadcast %24 : vector<16x8x1xf32> to vector<16x8x32xf32>
    %26 = arith.mulf %25, %0 : vector<16x8x32xf32>
    %cst_11 = arith.constant dense<0.000000e+00> : vector<16x32xf32>
    %27 = vector.multi_reduction <add>, %26, %cst_11 [1] : vector<16x8x32xf32> to vector<16x32xf32>
    %28 = vector.shape_cast %27 : vector<16x32xf32> to vector<16x1x32xf32>
    %c0_12 = arith.constant 0 : index
    %c0_13 = arith.constant 0 : index
    %c0_14 = arith.constant 0 : index
    %29 = vector.load %arg3[%c0_12, %c0_13, %c0_14] : memref<16x1x32xf32, #tpu.memory_space<vmem>>, vector<16x1x32xf32>
    tpu.vector_store %arg3[%c0_12, %c0_13, %c0_14], %28 {strides = array<i32>} : memref<16x1x32xf32, #tpu.memory_space<vmem>>, vector<16x1x32xf32>,
    return
  }
}

</mosaic_0001>

<llo_original>
// kernel: tpu_custom_call.1
$region0: #{tpu_custom_call.1}
  #allocation0 [shape = 'u32[]', space=smem, size = 0x4, offset = 0x4, fixed_abs, tag = 'smem constant byte address 0x4 - core index']
  #allocation1 [shape = 'u32[144,128]{1,0:T(1,128)}', space=vmem, size = 0x12000, scoped, tag = 'internal scratch']
  %s0 = inlined_call_operand.hbm [shape: f32[16,8,32], index: 0, kind: input, shape index: {}]
  %s1 = inlined_call_operand.vmem [shape: f32[32,16], index: 1, kind: input, shape index: {}]
  %s2 = inlined_call_operand.vmem [shape: f32[1,1,16], index: 2, kind: input, shape index: {}]
  %s3 = inlined_call_operand.hbm [shape: f32[16,1,32], index: 3, kind: output, shape index: {}]
  %s4 = sld [smem:[#allocation0]]
  $region26: #{tpu_custom_call.1} parent=0
    _
  %s6 = ssub.s32 1, %s4
  %s7 = scalar_select 0, %s6, %s4
  $region1: #{tpu_custom_call.1} parent=0
    #allocation2 [shape = 'u8[65536]{0}', space=vmem, size = 0x10000, scoped, tag = 'input window, operand 0, single buffered']
    #allocation3 [shape = 's32[1]{0}', space=sflag, size = 0x4, scoped, tag = 'scoped memory for tpu_custom_call.1']
    #allocation4 [shape = 's32[1]{0}', space=sflag, size = 0x4, scoped, tag = 'scoped memory for tpu_custom_call.1']
    #allocation5 [shape = 'u8[8192]{0}', space=vmem, size = 0x2000, scoped, tag = 'output window, operand 0, single buffered']
    %8 = vsyncpa [#allocation3], 0
    %9 = vsyncpa [#allocation4], 0
    // Predicated region
    $region2: #{tpu_custom_call.1} parent=1 // pred_check
      _
    $region3: #{tpu_custom_call.1} parent=1 // pred_check_branch
      %11 = sbr.rel (0) target = $region5
    $region4: #{tpu_custom_call.1} parent=1 // pred_region
      %s13 = ssub.s32 2048, 2048
      %14 = vsyncadd [#allocation3], %s13
      %s15 = sshll.u32 [#allocation2], 4
      %s16 = int_to_ptr.vmem [resolvable:$true] %s15
      %21 = dma.hbm_to_vmem [thread:$0]  %s0, 2048, %s16, [#allocation3], 128, 128, 8
    $region5: #{tpu_custom_call.1} parent=1 // pred_fallthru
      _
    // Predicated region
    $region6: #{tpu_custom_call.1} parent=1 // pred_check
      _
    $region7: #{tpu_custom_call.1} parent=1 // pred_check_branch
      %23 = sbr.rel (0) target = $region9
    $region8: #{tpu_custom_call.1} parent=1 // pred_region
      _
    $region9: #{tpu_custom_call.1} parent=1 // pred_fallthru
      _
    // Predicated region
    $region10: #{tpu_custom_call.1} parent=1 // pred_check
      _
    $region11: #{tpu_custom_call.1} parent=1 // pred_check_branch
      %25 = sbr.rel (0) target = $region13
    $region12: #{tpu_custom_call.1} parent=1 // pred_region
      _
    $region13: #{tpu_custom_call.1} parent=1 // pred_fallthru
      _
    // Predicated region
    $region14: #{tpu_custom_call.1} parent=1 // pred_check
      _
    $region15: #{tpu_custom_call.1} parent=1 // pred_check_branch
      %27 = sbr.rel (0) target = $region17
    $region16: #{tpu_custom_call.1} parent=1 // pred_region
      %28 = dma.done [#allocation3], 2048
    $region17: #{tpu_custom_call.1} parent=1 // pred_fallthru
      _
    %v29 = vld [vmem:[#allocation2] sm:$0xff]
    %v30 = vld [vmem:[#allocation2 + $0x8] sm:$0xff]
    %v31 = vld [vmem:[#allocation2 + $0x10] sm:$0xff]
    %v32 = vld [vmem:[#allocation2 + $0x18] sm:$0xff]
    %v33 = vld [vmem:[#allocation2 + $0x20] sm:$0xff]
    %v34 = vld [vmem:[#allocation2 + $0x28] sm:$0xff]
    %v35 = vld [vmem:[#allocation2 + $0x30] sm:$0xff]
    %v36 = vld [vmem:[#allocation2 + $0x38] sm:$0xff]
    %v37 = vld [vmem:[#allocation2 + $0x40] sm:$0xff]
    %v38 = vld [vmem:[#allocation2 + $0x48] sm:$0xff]
    %v39 = vld [vmem:[#allocation2 + $0x50] sm:$0xff]
    %v40 = vld [vmem:[#allocation2 + $0x58] sm:$0xff]
    %v41 = vld [vmem:[#allocation2 + $0x60] sm:$0xff]
    %v42 = vld [vmem:[#allocation2 + $0x68] sm:$0xff]
    %v43 = vld [vmem:[#allocation2 + $0x70] sm:$0xff]
    %v44 = vld [vmem:[#allocation2 + $0x78] sm:$0xff]
    %v45 = vld [vmem:[%s1] sm:$0xff]
    %v46 = vld [vmem:[%s1 + $0x8] sm:$0xff]
    %v47 = vld [vmem:[%s1 + $0x10] sm:$0xff]
    %v48 = vld [vmem:[%s1 + $0x18] sm:$0xff]
    %vm49 = vcmask 261120
    %v51 = vsel %vm49, %v29, 0
    %v54 = vsel %vm49, %v30, 0
    %v57 = vsel %vm49, %v31, 0
    %v60 = vsel %vm49, %v32, 0
    %v63 = vsel %vm49, %v33, 0
    %v66 = vsel %vm49, %v34, 0
    %v69 = vsel %vm49, %v35, 0
    %v72 = vsel %vm49, %v36, 0
    %v75 = vsel %vm49, %v37, 0
    %v78 = vsel %vm49, %v38, 0
    %v81 = vsel %vm49, %v39, 0
    %v84 = vsel %vm49, %v40, 0
    %v87 = vsel %vm49, %v41, 0
    %v90 = vsel %vm49, %v42, 0
    %v93 = vsel %vm49, %v43, 0
    %v96 = vsel %vm49, %v44, 0
    %98 = vmatprep.subr.mxu0 0.0
    %99 = vmatpush1.msra.mxu0 %v45
    %100 = vmatprep.subr.mxu0 0.0
    %101 = vmatpush1.msra.mxu0 %v46
    %102 = vmatprep.subr.mxu0 0.0
    %103 = vmatpush1.msra.mxu0 %v47
    %104 = vmatprep.subr.mxu0 0.0
    %105 = vmatpush1.msra.mxu0 %v48
    %106 = vmatprep.subr.mxu0 0.0
    %107 = vmatpush1.msra.mxu0 0.0
    %108 = vmatprep.subr.mxu0 0.0
    %109 = vmatpush1.msra.mxu0 0.0
    %110 = vmatprep.subr.mxu0 0.0
    %111 = vmatpush1.msra.mxu0 0.0
    %112 = vmatprep.subr.mxu0 0.0
    %113 = vmatpush1.msra.mxu0 0.0
    %114 = vmatprep.subr.mxu0 0.0
    %115 = vmatpush1.msra.mxu0 0.0
    %116 = vmatprep.subr.mxu0 0.0
    %117 = vmatpush1.msra.mxu0 0.0
    %118 = vmatprep.subr.mxu0 0.0
    %119 = vmatpush1.msra.mxu0 0.0
    %120 = vmatprep.subr.mxu0 0.0
    %121 = vmatpush1.msra.mxu0 0.0
    %122 = vmatprep.subr.mxu0 0.0
    %123 = vmatpush1.msra.mxu0 0.0
    %124 = vmatprep.subr.mxu0 0.0
    %125 = vmatpush1.msra.mxu0 0.0
    %126 = vmatprep.subr.mxu0 0.0
    %127 = vmatpush1.msra.mxu0 0.0
    %128 = vmatprep.subr.mxu0 0.0
    %129 = vmatpush1.msra.mxu0 0.0
    %130 = vmatprep.subr.mxu0 0.0
    %131 = vmatpush1.msra.mxu0 0.0
    %132 = vmatprep.subr.mxu0 0.0
    %133 = vmatpush1.msra.mxu0 0.0
    %134 = vmatprep.subr.mxu0 0.0
    %135 = vmatpush1.msra.mxu0 0.0
    %136 = vmatprep.subr.mxu0 0.0
    %137 = vmatpush1.msra.mxu0 0.0
    %138 = vmatprep.subr.mxu0 0.0
    %139 = vmatpush1.msra.mxu0 0.0
    %140 = vmatprep.subr.mxu0 0.0
    %141 = vmatpush1.msra.mxu0 0.0
    %142 = vmatprep.subr.mxu0 0.0
    %143 = vmatpush1.msra.mxu0 0.0
    %144 = vmatprep.subr.mxu0 0.0
    %145 = vmatpush1.msra.mxu0 0.0
    %146 = vmatprep.subr.mxu0 0.0
    %147 = vmatpush1.msra.mxu0 0.0
    %148 = vmatprep.subr.mxu0 0.0
    %149 = vmatpush1.msra.mxu0 0.0
    %150 = vmatprep.subr.mxu0 0.0
    %151 = vmatpush1.msra.mxu0 0.0
    %152 = vmatprep.subr.mxu0 0.0
    %153 = vmatpush1.msra.mxu0 0.0
    %154 = vmatprep.subr.mxu0 0.0
    %155 = vmatpush1.msra.mxu0 0.0
    %156 = vmatprep.subr.mxu0 0.0
    %157 = vmatpush1.msra.mxu0 0.0
    %158 = vmatprep.subr.mxu0 0.0
    %159 = vmatpush1.msra.mxu0 0.0
    %160 = vmatprep.subr.mxu0 0.0
    %161 = vmatpush1.msra.mxu0 0.0
    %162 = vmatprep.mubr.f32.mxu0 0.0
    %163 = vmatmul.mubr.f32.gmra.mrb[0].mxu0 %v51
    %v164 = vpop.f32.mrb[0].mxu0
    %v165 = vadd.f32 0.0, %v164
    %v166 = vpop.f32.mrb[0].mxu0
    %167 = vmatprep.mubr.f32.mxu0 0.0
    %168 = vmatmul.mubr.f32.gmra.mrb[0].mxu0 %v54
    %v169 = vpop.f32.mrb[0].mxu0
    %v170 = vadd.f32 0.0, %v169
    %v171 = vpop.f32.mrb[0].mxu0
    %172 = vmatprep.mubr.f32.mxu0 0.0
    %173 = vmatmul.mubr.f32.gmra.mrb[0].mxu0 %v57
    %v174 = vpop.f32.mrb[0].mxu0
    %v175 = vadd.f32 0.0, %v174
    %v176 = vpop.f32.mrb[0].mxu0
    %177 = vmatprep.mubr.f32.mxu0 0.0
    %178 = vmatmul.mubr.f32.gmra.mrb[0].mxu0 %v60
    %v179 = vpop.f32.mrb[0].mxu0
    %v180 = vadd.f32 0.0, %v179
    %v181 = vpop.f32.mrb[0].mxu0
    %182 = vmatprep.mubr.f32.mxu0 0.0
    %183 = vmatmul.mubr.f32.gmra.mrb[0].mxu0 %v63
    %v184 = vpop.f32.mrb[0].mxu0
    %v185 = vadd.f32 0.0, %v184
    %v186 = vpop.f32.mrb[0].mxu0
    %187 = vmatprep.mubr.f32.mxu0 0.0
    %188 = vmatmul.mubr.f32.gmra.mrb[0].mxu0 %v66
    %v189 = vpop.f32.mrb[0].mxu0
    %v190 = vadd.f32 0.0, %v189
    %v191 = vpop.f32.mrb[0].mxu0
    %192 = vmatprep.mubr.f32.mxu0 0.0
    %193 = vmatmul.mubr.f32.gmra.mrb[0].mxu0 %v69
    %v194 = vpop.f32.mrb[0].mxu0
    %v195 = vadd.f32 0.0, %v194
    %v196 = vpop.f32.mrb[0].mxu0
    %197 = vmatprep.mubr.f32.mxu0 0.0
    %198 = vmatmul.mubr.f32.gmra.mrb[0].mxu0 %v72
    %v199 = vpop.f32.mrb[0].mxu0
    %v200 = vadd.f32 0.0, %v199
    %v201 = vpop.f32.mrb[0].mxu0
    %202 = vmatprep.mubr.f32.mxu0 0.0
    %203 = vmatmul.mubr.f32.gmra.mrb[0].mxu0 %v75
    %v204 = vpop.f32.mrb[0].mxu0
    %v205 = vadd.f32 0.0, %v204
    %v206 = vpop.f32.mrb[0].mxu0
    %207 = vmatprep.mubr.f32.mxu0 0.0
    %208 = vmatmul.mubr.f32.gmra.mrb[0].mxu0 %v78
    %v209 = vpop.f32.mrb[0].mxu0
    %v210 = vadd.f32 0.0, %v209
    %v211 = vpop.f32.mrb[0].mxu0
    %212 = vmatprep.mubr.f32.mxu0 0.0
    %213 = vmatmul.mubr.f32.gmra.mrb[0].mxu0 %v81
    %v214 = vpop.f32.mrb[0].mxu0
    %v215 = vadd.f32 0.0, %v214
    %v216 = vpop.f32.mrb[0].mxu0
    %217 = vmatprep.mubr.f32.mxu0 0.0
    %218 = vmatmul.mubr.f32.gmra.mrb[0].mxu0 %v84
    %v219 = vpop.f32.mrb[0].mxu0
    %v220 = vadd.f32 0.0, %v219
    %v221 = vpop.f32.mrb[0].mxu0
    %222 = vmatprep.mubr.f32.mxu0 0.0
    %223 = vmatmul.mubr.f32.gmra.mrb[0].mxu0 %v87
    %v224 = vpop.f32.mrb[0].mxu0
    %v225 = vadd.f32 0.0, %v224
    %v226 = vpop.f32.mrb[0].mxu0
    %227 = vmatprep.mubr.f32.mxu0 0.0
    %228 = vmatmul.mubr.f32.gmra.mrb[0].mxu0 %v90
    %v229 = vpop.f32.mrb[0].mxu0
    %v230 = vadd.f32 0.0, %v229
    %v231 = vpop.f32.mrb[0].mxu0
    %232 = vmatprep.mubr.f32.mxu0 0.0
    %233 = vmatmul.mubr.f32.gmra.mrb[0].mxu0 %v93
    %v234 = vpop.f32.mrb[0].mxu0
    %v235 = vadd.f32 0.0, %v234
    %v236 = vpop.f32.mrb[0].mxu0
    %237 = vmatprep.mubr.f32.mxu0 0.0
    %238 = vmatmul.mubr.f32.gmra.mrb[0].mxu0 %v96
    %v239 = vpop.f32.mrb[0].mxu0
    %v240 = vadd.f32 0.0, %v239
    %v241 = vpop.f32.mrb[0].mxu0
    %242 = vdwg.mxu0
    %v243 = vtanh.pop %v165
    %v244 = vtanh.pop %v170
    %v245 = vtanh.pop %v175
    %v246 = vtanh.pop %v180
    %v247 = vtanh.pop %v185
    %v248 = vtanh.pop %v190
    %v249 = vtanh.pop %v195
    %v250 = vtanh.pop %v200
    %v251 = vtanh.pop %v205
    %v252 = vtanh.pop %v210
    %v253 = vtanh.pop %v215
    %v254 = vtanh.pop %v220
    %v255 = vtanh.pop %v225
    %v256 = vtanh.pop %v230
    %v257 = vtanh.pop %v235
    %v258 = vtanh.pop %v240
    %v259 = vld [vmem:[%s2] sm:$0x1]
    %v261 = vlaneseq
    %v262 = vshrl.u32 %v261, 7
    %v263 = vsub.s32 0, %v262
    %v264 = vrot.slane %v259, %v263
    %v266 = vmul.f32 %v243, %v264
    %v267 = vmul.f32 %v244, %v264
    %v268 = vmul.f32 %v245, %v264
    %v269 = vmul.f32 %v246, %v264
    %v270 = vmul.f32 %v247, %v264
    %v271 = vmul.f32 %v248, %v264
    %v272 = vmul.f32 %v249, %v264
    %v273 = vmul.f32 %v250, %v264
    %v274 = vmul.f32 %v251, %v264
    %v275 = vmul.f32 %v252, %v264
    %v276 = vmul.f32 %v253, %v264
    %v277 = vmul.f32 %v254, %v264
    %v278 = vmul.f32 %v255, %v264
    %v279 = vmul.f32 %v256, %v264
    %v280 = vmul.f32 %v257, %v264
    %v281 = vmul.f32 %v258, %v264
    %vm282 = vcmask 130048
    %v283 = vsel %vm282, %v266, 0.0
    %284 = vadd.xlane.f32.xlu0 %v283
    %v285 = vpop.xlane.xlu0 %284
    %v286 = vsel %vm282, %v267, 0.0
    %287 = vadd.xlane.f32.xlu0 %v286
    %v288 = vpop.xlane.xlu0 %287
    %v289 = vsel %vm282, %v268, 0.0
    %290 = vadd.xlane.f32.xlu0 %v289
    %v291 = vpop.xlane.xlu0 %290
    %v292 = vsel %vm282, %v269, 0.0
    %293 = vadd.xlane.f32.xlu0 %v292
    %v294 = vpop.xlane.xlu0 %293
    %v295 = vsel %vm282, %v270, 0.0
    %296 = vadd.xlane.f32.xlu0 %v295
    %v297 = vpop.xlane.xlu0 %296
    %v298 = vsel %vm282, %v271, 0.0
    %299 = vadd.xlane.f32.xlu0 %v298
    %v300 = vpop.xlane.xlu0 %299
    %v301 = vsel %vm282, %v272, 0.0
    %302 = vadd.xlane.f32.xlu0 %v301
    %v303 = vpop.xlane.xlu0 %302
    %v304 = vsel %vm282, %v273, 0.0
    %305 = vadd.xlane.f32.xlu0 %v304
    %v306 = vpop.xlane.xlu0 %305
    %v307 = vsel %vm282, %v274, 0.0
    %308 = vadd.xlane.f32.xlu0 %v307
    %v309 = vpop.xlane.xlu0 %308
    %v310 = vsel %vm282, %v275, 0.0
    %311 = vadd.xlane.f32.xlu0 %v310
    %v312 = vpop.xlane.xlu0 %311
    %v313 = vsel %vm282, %v276, 0.0
    %314 = vadd.xlane.f32.xlu0 %v313
    %v315 = vpop.xlane.xlu0 %314
    %v316 = vsel %vm282, %v277, 0.0
    %317 = vadd.xlane.f32.xlu0 %v316
    %v318 = vpop.xlane.xlu0 %317
    %v319 = vsel %vm282, %v278, 0.0
    %320 = vadd.xlane.f32.xlu0 %v319
    %v321 = vpop.xlane.xlu0 %320
    %v322 = vsel %vm282, %v279, 0.0
    %323 = vadd.xlane.f32.xlu0 %v322
    %v324 = vpop.xlane.xlu0 %323
    %v325 = vsel %vm282, %v280, 0.0
    %326 = vadd.xlane.f32.xlu0 %v325
    %v327 = vpop.xlane.xlu0 %326
    %v328 = vsel %vm282, %v281, 0.0
    %329 = vadd.xlane.f32.xlu0 %v328
    %v330 = vpop.xlane.xlu0 %329
    %v331 = vrot.slane %v285, 4
    %v332 = vmax.f32 %v285, %v331
    %v333 = vrot.slane %v332, 2
    %v334 = vmax.f32 %v332, %v333
    %v335 = vrot.slane %v334, 1
    %v336 = vmax.f32 %v334, %v335
    %v337 = vrot.slane %v288, 4
    %v338 = vmax.f32 %v288, %v337
    %v339 = vrot.slane %v338, 2
    %v340 = vmax.f32 %v338, %v339
    %v341 = vrot.slane %v340, 1
    %v342 = vmax.f32 %v340, %v341
    %v343 = vrot.slane %v291, 4
    %v344 = vmax.f32 %v291, %v343
    %v345 = vrot.slane %v344, 2
    %v346 = vmax.f32 %v344, %v345
    %v347 = vrot.slane %v346, 1
    %v348 = vmax.f32 %v346, %v347
    %v349 = vrot.slane %v294, 4
    %v350 = vmax.f32 %v294, %v349
    %v351 = vrot.slane %v350, 2
    %v352 = vmax.f32 %v350, %v351
    %v353 = vrot.slane %v352, 1
    %v354 = vmax.f32 %v352, %v353
    %v355 = vrot.slane %v297, 4
    %v356 = vmax.f32 %v297, %v355
    %v357 = vrot.slane %v356, 2
    %v358 = vmax.f32 %v356, %v357
    %v359 = vrot.slane %v358, 1
    %v360 = vmax.f32 %v358, %v359
    %v361 = vrot.slane %v300, 4
    %v362 = vmax.f32 %v300, %v361
    %v363 = vrot.slane %v362, 2
    %v364 = vmax.f32 %v362, %v363
    %v365 = vrot.slane %v364, 1
    %v366 = vmax.f32 %v364, %v365
    %v367 = vrot.slane %v303, 4
    %v368 = vmax.f32 %v303, %v367
    %v369 = vrot.slane %v368, 2
    %v370 = vmax.f32 %v368, %v369
    %v371 = vrot.slane %v370, 1
    %v372 = vmax.f32 %v370, %v371
    %v373 = vrot.slane %v306, 4
    %v374 = vmax.f32 %v306, %v373
    %v375 = vrot.slane %v374, 2
    %v376 = vmax.f32 %v374, %v375
    %v377 = vrot.slane %v376, 1
    %v378 = vmax.f32 %v376, %v377
    %v379 = vrot.slane %v309, 4
    %v380 = vmax.f32 %v309, %v379
    %v381 = vrot.slane %v380, 2
    %v382 = vmax.f32 %v380, %v381
    %v383 = vrot.slane %v382, 1
    %v384 = vmax.f32 %v382, %v383
    %v385 = vrot.slane %v312, 4
    %v386 = vmax.f32 %v312, %v385
    %v387 = vrot.slane %v386, 2
    %v388 = vmax.f32 %v386, %v387
    %v389 = vrot.slane %v388, 1
    %v390 = vmax.f32 %v388, %v389
    %v391 = vrot.slane %v315, 4
    %v392 = vmax.f32 %v315, %v391
    %v393 = vrot.slane %v392, 2
    %v394 = vmax.f32 %v392, %v393
    %v395 = vrot.slane %v394, 1
    %v396 = vmax.f32 %v394, %v395
    %v397 = vrot.slane %v318, 4
    %v398 = vmax.f32 %v318, %v397
    %v399 = vrot.slane %v398, 2
    %v400 = vmax.f32 %v398, %v399
    %v401 = vrot.slane %v400, 1
    %v402 = vmax.f32 %v400, %v401
    %v403 = vrot.slane %v321, 4
    %v404 = vmax.f32 %v321, %v403
    %v405 = vrot.slane %v404, 2
    %v406 = vmax.f32 %v404, %v405
    %v407 = vrot.slane %v406, 1
    %v408 = vmax.f32 %v406, %v407
    %v409 = vrot.slane %v324, 4
    %v410 = vmax.f32 %v324, %v409
    %v411 = vrot.slane %v410, 2
    %v412 = vmax.f32 %v410, %v411
    %v413 = vrot.slane %v412, 1
    %v414 = vmax.f32 %v412, %v413
    %v415 = vrot.slane %v327, 4
    %v416 = vmax.f32 %v327, %v415
    %v417 = vrot.slane %v416, 2
    %v418 = vmax.f32 %v416, %v417
    %v419 = vrot.slane %v418, 1
    %v420 = vmax.f32 %v418, %v419
    %v421 = vrot.slane %v330, 4
    %v422 = vmax.f32 %v330, %v421
    %v423 = vrot.slane %v422, 2
    %v424 = vmax.f32 %v422, %v423
    %v425 = vrot.slane %v424, 1
    %v426 = vmax.f32 %v424, %v425
    %v427 = vsub.f32 %v285, %v336
    %v428 = vsub.f32 %v288, %v342
    %v429 = vsub.f32 %v291, %v348
    %v430 = vsub.f32 %v294, %v354
    %v431 = vsub.f32 %v297, %v360
    %v432 = vsub.f32 %v300, %v366
    %v433 = vsub.f32 %v303, %v372
    %v434 = vsub.f32 %v306, %v378
    %v435 = vsub.f32 %v309, %v384
    %v436 = vsub.f32 %v312, %v390
    %v437 = vsub.f32 %v315, %v396
    %v438 = vsub.f32 %v318, %v402
    %v439 = vsub.f32 %v321, %v408
    %v440 = vsub.f32 %v324, %v414
    %v441 = vsub.f32 %v327, %v420
    %v442 = vsub.f32 %v330, %v426
    %v443 = vmul.f32 %v427, 1.442695
    %v444 = vpow.pop %v443
    %v445 = vmul.f32 %v428, 1.442695
    %v446 = vpow.pop %v445
    %v447 = vmul.f32 %v429, 1.442695
    %v448 = vpow.pop %v447
    %v449 = vmul.f32 %v430, 1.442695
    %v450 = vpow.pop %v449
    %v451 = vmul.f32 %v431, 1.442695
    %v452 = vpow.pop %v451
    %v453 = vmul.f32 %v432, 1.442695
    %v454 = vpow.pop %v453
    %v455 = vmul.f32 %v433, 1.442695
    %v456 = vpow.pop %v455
    %v457 = vmul.f32 %v434, 1.442695
    %v458 = vpow.pop %v457
    %v459 = vmul.f32 %v435, 1.442695
    %v460 = vpow.pop %v459
    %v461 = vmul.f32 %v436, 1.442695
    %v462 = vpow.pop %v461
    %v463 = vmul.f32 %v437, 1.442695
    %v464 = vpow.pop %v463
    %v465 = vmul.f32 %v438, 1.442695
    %v466 = vpow.pop %v465
    %v467 = vmul.f32 %v439, 1.442695
    %v468 = vpow.pop %v467
    %v469 = vmul.f32 %v440, 1.442695
    %v470 = vpow.pop %v469
    %v471 = vmul.f32 %v441, 1.442695
    %v472 = vpow.pop %v471
    %v473 = vmul.f32 %v442, 1.442695
    %v474 = vpow.pop %v473
    %v475 = vrot.slane %v444, 4
    %v476 = vadd.f32 %v444, %v475
    %v477 = vrot.slane %v476, 2
    %v478 = vadd.f32 %v476, %v477
    %v479 = vrot.slane %v478, 1
    %v480 = vadd.f32 %v478, %v479
    %v481 = vrot.slane %v446, 4
    %v482 = vadd.f32 %v446, %v481
    %v483 = vrot.slane %v482, 2
    %v484 = vadd.f32 %v482, %v483
    %v485 = vrot.slane %v484, 1
    %v486 = vadd.f32 %v484, %v485
    %v487 = vrot.slane %v448, 4
    %v488 = vadd.f32 %v448, %v487
    %v489 = vrot.slane %v488, 2
    %v490 = vadd.f32 %v488, %v489
    %v491 = vrot.slane %v490, 1
    %v492 = vadd.f32 %v490, %v491
    %v493 = vrot.slane %v450, 4
    %v494 = vadd.f32 %v450, %v493
    %v495 = vrot.slane %v494, 2
    %v496 = vadd.f32 %v494, %v495
    %v497 = vrot.slane %v496, 1
    %v498 = vadd.f32 %v496, %v497
    %v499 = vrot.slane %v452, 4
    %v500 = vadd.f32 %v452, %v499
    %v501 = vrot.slane %v500, 2
    %v502 = vadd.f32 %v500, %v501
    %v503 = vrot.slane %v502, 1
    %v504 = vadd.f32 %v502, %v503
    %v505 = vrot.slane %v454, 4
    %v506 = vadd.f32 %v454, %v505
    %v507 = vrot.slane %v506, 2
    %v508 = vadd.f32 %v506, %v507
    %v509 = vrot.slane %v508, 1
    %v510 = vadd.f32 %v508, %v509
    %v511 = vrot.slane %v456, 4
    %v512 = vadd.f32 %v456, %v511
    %v513 = vrot.slane %v512, 2
    %v514 = vadd.f32 %v512, %v513
    %v515 = vrot.slane %v514, 1
    %v516 = vadd.f32 %v514, %v515
    %v517 = vrot.slane %v458, 4
    %v518 = vadd.f32 %v458, %v517
    %v519 = vrot.slane %v518, 2
    %v520 = vadd.f32 %v518, %v519
    %v521 = vrot.slane %v520, 1
    %v522 = vadd.f32 %v520, %v521
    %v523 = vrot.slane %v460, 4
    %v524 = vadd.f32 %v460, %v523
    %v525 = vrot.slane %v524, 2
    %v526 = vadd.f32 %v524, %v525
    %v527 = vrot.slane %v526, 1
    %v528 = vadd.f32 %v526, %v527
    %v529 = vrot.slane %v462, 4
    %v530 = vadd.f32 %v462, %v529
    %v531 = vrot.slane %v530, 2
    %v532 = vadd.f32 %v530, %v531
    %v533 = vrot.slane %v532, 1
    %v534 = vadd.f32 %v532, %v533
    %v535 = vrot.slane %v464, 4
    %v536 = vadd.f32 %v464, %v535
    %v537 = vrot.slane %v536, 2
    %v538 = vadd.f32 %v536, %v537
    %v539 = vrot.slane %v538, 1
    %v540 = vadd.f32 %v538, %v539
    %v541 = vrot.slane %v466, 4
    %v542 = vadd.f32 %v466, %v541
    %v543 = vrot.slane %v542, 2
    %v544 = vadd.f32 %v542, %v543
    %v545 = vrot.slane %v544, 1
    %v546 = vadd.f32 %v544, %v545
    %v547 = vrot.slane %v468, 4
    %v548 = vadd.f32 %v468, %v547
    %v549 = vrot.slane %v548, 2
    %v550 = vadd.f32 %v548, %v549
    %v551 = vrot.slane %v550, 1
    %v552 = vadd.f32 %v550, %v551
    %v553 = vrot.slane %v470, 4
    %v554 = vadd.f32 %v470, %v553
    %v555 = vrot.slane %v554, 2
    %v556 = vadd.f32 %v554, %v555
    %v557 = vrot.slane %v556, 1
    %v558 = vadd.f32 %v556, %v557
    %v559 = vrot.slane %v472, 4
    %v560 = vadd.f32 %v472, %v559
    %v561 = vrot.slane %v560, 2
    %v562 = vadd.f32 %v560, %v561
    %v563 = vrot.slane %v562, 1
    %v564 = vadd.f32 %v562, %v563
    %v565 = vrot.slane %v474, 4
    %v566 = vadd.f32 %v474, %v565
    %v567 = vrot.slane %v566, 2
    %v568 = vadd.f32 %v566, %v567
    %v569 = vrot.slane %v568, 1
    %v570 = vadd.f32 %v568, %v569
    %v571 = vrcp.pop %v480
    %v572 = vrcp.pop %v486
    %v573 = vrcp.pop %v492
    %v574 = vrcp.pop %v498
    %v575 = vrcp.pop %v504
    %v576 = vrcp.pop %v510
    %v577 = vrcp.pop %v516
    %v578 = vrcp.pop %v522
    %v579 = vrcp.pop %v528
    %v580 = vrcp.pop %v534
    %v581 = vrcp.pop %v540
    %v582 = vrcp.pop %v546
    %v583 = vrcp.pop %v552
    %v584 = vrcp.pop %v558
    %v585 = vrcp.pop %v564
    %v586 = vrcp.pop %v570
    %v587 = vmul.f32 %v480, %v571
    %v588 = vmul.f32 %v486, %v572
    %v589 = vmul.f32 %v492, %v573
    %v590 = vmul.f32 %v498, %v574
    %v591 = vmul.f32 %v504, %v575
    %v592 = vmul.f32 %v510, %v576
    %v593 = vmul.f32 %v516, %v577
    %v594 = vmul.f32 %v522, %v578
    %v595 = vmul.f32 %v528, %v579
    %v596 = vmul.f32 %v534, %v580
    %v597 = vmul.f32 %v540, %v581
    %v598 = vmul.f32 %v546, %v582
    %v599 = vmul.f32 %v552, %v583
    %v600 = vmul.f32 %v558, %v584
    %v601 = vmul.f32 %v564, %v585
    %v602 = vmul.f32 %v570, %v586
    %v603 = vsub.f32 2.0, %v587
    %v604 = vsub.f32 2.0, %v588
    %v605 = vsub.f32 2.0, %v589
    %v606 = vsub.f32 2.0, %v590
    %v607 = vsub.f32 2.0, %v591
    %v608 = vsub.f32 2.0, %v592
    %v609 = vsub.f32 2.0, %v593
    %v610 = vsub.f32 2.0, %v594
    %v611 = vsub.f32 2.0, %v595
    %v612 = vsub.f32 2.0, %v596
    %v613 = vsub.f32 2.0, %v597
    %v614 = vsub.f32 2.0, %v598
    %v615 = vsub.f32 2.0, %v599
    %v616 = vsub.f32 2.0, %v600
    %v617 = vsub.f32 2.0, %v601
    %v618 = vsub.f32 2.0, %v602
    %v619 = vmul.f32 %v571, %v603
    %v620 = vmul.f32 %v572, %v604
    %v621 = vmul.f32 %v573, %v605
    %v622 = vmul.f32 %v574, %v606
    %v623 = vmul.f32 %v575, %v607
    %v624 = vmul.f32 %v576, %v608
    %v625 = vmul.f32 %v577, %v609
    %v626 = vmul.f32 %v578, %v610
    %v627 = vmul.f32 %v579, %v611
    %v628 = vmul.f32 %v580, %v612
    %v629 = vmul.f32 %v581, %v613
    %v630 = vmul.f32 %v582, %v614
    %v631 = vmul.f32 %v583, %v615
    %v632 = vmul.f32 %v584, %v616
    %v633 = vmul.f32 %v585, %v617
    %v634 = vmul.f32 %v586, %v618
    %v635 = vmul.f32 %v444, %v619
    %v636 = vmul.f32 %v446, %v620
    %v637 = vmul.f32 %v448, %v621
    %v638 = vmul.f32 %v450, %v622
    %v639 = vmul.f32 %v452, %v623
    %v640 = vmul.f32 %v454, %v624
    %v641 = vmul.f32 %v456, %v625
    %v642 = vmul.f32 %v458, %v626
    %v643 = vmul.f32 %v460, %v627
    %v644 = vmul.f32 %v462, %v628
    %v645 = vmul.f32 %v464, %v629
    %v646 = vmul.f32 %v466, %v630
    %v647 = vmul.f32 %v468, %v631
    %v648 = vmul.f32 %v470, %v632
    %v649 = vmul.f32 %v472, %v633
    %v650 = vmul.f32 %v474, %v634
    %v651 = vmul.f32 %v635, %v29
    %v652 = vmul.f32 %v636, %v30
    %v653 = vmul.f32 %v637, %v31
    %v654 = vmul.f32 %v638, %v32
    %v655 = vmul.f32 %v639, %v33
    %v656 = vmul.f32 %v640, %v34
    %v657 = vmul.f32 %v641, %v35
    %v658 = vmul.f32 %v642, %v36
    %v659 = vmul.f32 %v643, %v37
    %v660 = vmul.f32 %v644, %v38
    %v661 = vmul.f32 %v645, %v39
    %v662 = vmul.f32 %v646, %v40
    %v663 = vmul.f32 %v647, %v41
    %v664 = vmul.f32 %v648, %v42
    %v665 = vmul.f32 %v649, %v43
    %v666 = vmul.f32 %v650, %v44
    %v667 = vsel %vm49, %v651, 0.0
    %v668 = vrot.slane %v667, 4
    %v669 = vadd.f32 %v667, %v668
    %v670 = vrot.slane %v669, 2
    %v671 = vadd.f32 %v669, %v670
    %v672 = vrot.slane %v671, 1
    %v673 = vadd.f32 %v671, %v672
    %v674 = vsel %vm49, %v652, 0.0
    %v675 = vrot.slane %v674, 4
    %v676 = vadd.f32 %v674, %v675
    %v677 = vrot.slane %v676, 2
    %v678 = vadd.f32 %v676, %v677
    %v679 = vrot.slane %v678, 1
    %v680 = vadd.f32 %v678, %v679
    %v681 = vsel %vm49, %v653, 0.0
    %v682 = vrot.slane %v681, 4
    %v683 = vadd.f32 %v681, %v682
    %v684 = vrot.slane %v683, 2
    %v685 = vadd.f32 %v683, %v684
    %v686 = vrot.slane %v685, 1
    %v687 = vadd.f32 %v685, %v686
    %v688 = vsel %vm49, %v654, 0.0
    %v689 = vrot.slane %v688, 4
    %v690 = vadd.f32 %v688, %v689
    %v691 = vrot.slane %v690, 2
    %v692 = vadd.f32 %v690, %v691
    %v693 = vrot.slane %v692, 1
    %v694 = vadd.f32 %v692, %v693
    %v695 = vsel %vm49, %v655, 0.0
    %v696 = vrot.slane %v695, 4
    %v697 = vadd.f32 %v695, %v696
    %v698 = vrot.slane %v697, 2
    %v699 = vadd.f32 %v697, %v698
    %v700 = vrot.slane %v699, 1
    %v701 = vadd.f32 %v699, %v700
    %v702 = vsel %vm49, %v656, 0.0
    %v703 = vrot.slane %v702, 4
    %v704 = vadd.f32 %v702, %v703
    %v705 = vrot.slane %v704, 2
    %v706 = vadd.f32 %v704, %v705
    %v707 = vrot.slane %v706, 1
    %v708 = vadd.f32 %v706, %v707
    %v709 = vsel %vm49, %v657, 0.0
    %v710 = vrot.slane %v709, 4
    %v711 = vadd.f32 %v709, %v710
    %v712 = vrot.slane %v711, 2
    %v713 = vadd.f32 %v711, %v712
    %v714 = vrot.slane %v713, 1
    %v715 = vadd.f32 %v713, %v714
    %v716 = vsel %vm49, %v658, 0.0
    %v717 = vrot.slane %v716, 4
    %v718 = vadd.f32 %v716, %v717
    %v719 = vrot.slane %v718, 2
    %v720 = vadd.f32 %v718, %v719
    %v721 = vrot.slane %v720, 1
    %v722 = vadd.f32 %v720, %v721
    %v723 = vsel %vm49, %v659, 0.0
    %v724 = vrot.slane %v723, 4
    %v725 = vadd.f32 %v723, %v724
    %v726 = vrot.slane %v725, 2
    %v727 = vadd.f32 %v725, %v726
    %v728 = vrot.slane %v727, 1
    %v729 = vadd.f32 %v727, %v728
    %v730 = vsel %vm49, %v660, 0.0
    %v731 = vrot.slane %v730, 4
    %v732 = vadd.f32 %v730, %v731
    %v733 = vrot.slane %v732, 2
    %v734 = vadd.f32 %v732, %v733
    %v735 = vrot.slane %v734, 1
    %v736 = vadd.f32 %v734, %v735
    %v737 = vsel %vm49, %v661, 0.0
    %v738 = vrot.slane %v737, 4
    %v739 = vadd.f32 %v737, %v738
    %v740 = vrot.slane %v739, 2
    %v741 = vadd.f32 %v739, %v740
    %v742 = vrot.slane %v741, 1
    %v743 = vadd.f32 %v741, %v742
    %v744 = vsel %vm49, %v662, 0.0
    %v745 = vrot.slane %v744, 4
    %v746 = vadd.f32 %v744, %v745
    %v747 = vrot.slane %v746, 2
    %v748 = vadd.f32 %v746, %v747
    %v749 = vrot.slane %v748, 1
    %v750 = vadd.f32 %v748, %v749
    %v751 = vsel %vm49, %v663, 0.0
    %v752 = vrot.slane %v751, 4
    %v753 = vadd.f32 %v751, %v752
    %v754 = vrot.slane %v753, 2
    %v755 = vadd.f32 %v753, %v754
    %v756 = vrot.slane %v755, 1
    %v757 = vadd.f32 %v755, %v756
    %v758 = vsel %vm49, %v664, 0.0
    %v759 = vrot.slane %v758, 4
    %v760 = vadd.f32 %v758, %v759
    %v761 = vrot.slane %v760, 2
    %v762 = vadd.f32 %v760, %v761
    %v763 = vrot.slane %v762, 1
    %v764 = vadd.f32 %v762, %v763
    %v765 = vsel %vm49, %v665, 0.0
    %v766 = vrot.slane %v765, 4
    %v767 = vadd.f32 %v765, %v766
    %v768 = vrot.slane %v767, 2
    %v769 = vadd.f32 %v767, %v768
    %v770 = vrot.slane %v769, 1
    %v771 = vadd.f32 %v769, %v770
    %v772 = vsel %vm49, %v666, 0.0
    %v773 = vrot.slane %v772, 4
    %v774 = vadd.f32 %v772, %v773
    %v775 = vrot.slane %v774, 2
    %v776 = vadd.f32 %v774, %v775
    %v777 = vrot.slane %v776, 1
    %v778 = vadd.f32 %v776, %v777
    %vm779 = vcmask 253952
    %780 = vst.msk [vmem:[#allocation5] sm:$0x1] %vm779, %v673
    %781 = vst.msk [vmem:[#allocation5 + $0x1] sm:$0x1] %vm779, %v680
    %782 = vst.msk [vmem:[#allocation5 + $0x2] sm:$0x1] %vm779, %v687
    %783 = vst.msk [vmem:[#allocation5 + $0x3] sm:$0x1] %vm779, %v694
    %784 = vst.msk [vmem:[#allocation5 + $0x4] sm:$0x1] %vm779, %v701
    %785 = vst.msk [vmem:[#allocation5 + $0x5] sm:$0x1] %vm779, %v708
    %786 = vst.msk [vmem:[#allocation5 + $0x6] sm:$0x1] %vm779, %v715
    %787 = vst.msk [vmem:[#allocation5 + $0x7] sm:$0x1] %vm779, %v722
    %788 = vst.msk [vmem:[#allocation5 + $0x8] sm:$0x1] %vm779, %v729
    %789 = vst.msk [vmem:[#allocation5 + $0x9] sm:$0x1] %vm779, %v736
    %790 = vst.msk [vmem:[#allocation5 + $0xa] sm:$0x1] %vm779, %v743
    %791 = vst.msk [vmem:[#allocation5 + $0xb] sm:$0x1] %vm779, %v750
    %792 = vst.msk [vmem:[#allocation5 + $0xc] sm:$0x1] %vm779, %v757
    %793 = vst.msk [vmem:[#allocation5 + $0xd] sm:$0x1] %vm779, %v764
    %794 = vst.msk [vmem:[#allocation5 + $0xe] sm:$0x1] %vm779, %v771
    %795 = vst.msk [vmem:[#allocation5 + $0xf] sm:$0x1] %vm779, %v778
    // Predicated region
    $region18: #{tpu_custom_call.1} parent=1 // pred_check
      _
    $region19: #{tpu_custom_call.1} parent=1 // pred_check_branch
      %797 = sbr.rel (0) target = $region21
    $region20: #{tpu_custom_call.1} parent=1 // pred_region
      %s799 = ssub.s32 256, 256
      %800 = vsyncadd [#allocation4], %s799
      %s801 = sshll.u32 [#allocation5], 4
      %s802 = int_to_ptr.vmem [resolvable:$true] %s801
      %807 = dma.vmem_to_hbm [thread:$0]  %s802, 256, %s3, [#allocation4], 16, 16, 1
    $region21: #{tpu_custom_call.1} parent=1 // pred_fallthru
      _
    // Predicated region
    $region22: #{tpu_custom_call.1} parent=1 // pred_check
      _
    $region23: #{tpu_custom_call.1} parent=1 // pred_check_branch
      %809 = sbr.rel (0) target = $region25
    $region24: #{tpu_custom_call.1} parent=1 // pred_region
      %810 = dma.done [#allocation4], 256
    $region25: #{tpu_custom_call.1} parent=1 // pred_fallthru
      _
    %811 = vsyncpa [#allocation3], 1
    %812 = vsyncpa [#allocation4], 1

</llo_original>
